<compile_context>
chip_gen: v5e
topology: v5e:2x2
jax: 0.10.0
libtpu: 0.0.40
codegen_flags: <defaults>
</compile_context>

<pallas_src>
import jax
import jax.numpy as jnp
from jax.experimental import pallas as pl
from jax.experimental.pallas import tpu as pltpu

BATCH = 256
IN_F = 2
HID_F = 4
OUT_F = 1

# Static offsets into the packed parameter vector (padded to 32 = pow2 floats,
# matching SMEM 1-D padding so no hidden over-allocation).
W1_OFF = 0                      # IN_F * HID_F = 8 entries, row-major (i, j)
B1_OFF = W1_OFF + IN_F * HID_F  # HID_F = 4 entries
W2_OFF = B1_OFF + HID_F         # HID_F * OUT_F = 4 entries, row-major (j, o)
B2_OFF = W2_OFF + HID_F * OUT_F  # OUT_F = 1 entry
N_PARAMS = B2_OFF + OUT_F        # 17
PARAMS_PADDED = 32               # next power of two


def mlp_kernel(x_ref, p_ref, o_ref):
    # x_ref : (B, IN_F)  f32 in VMEM (natural layout, no wrapper transpose)
    # p_ref : (PARAMS_PADDED,) f32 in SMEM, packed [w1 | b1 | w2 | b2 | pad]
    # o_ref : (B, OUT_F) f32 in VMEM
    x = x_ref[...]                      # single vld of the whole input tile
    x0 = x[:, 0:1]                      # (B, 1) — in-register slices
    x1 = x[:, 1:2]                      # (B, 1)

    # Bind all SMEM scalar reads to locals above the unrolled loop.
    w1 = [p_ref[W1_OFF + k] for k in range(IN_F * HID_F)]
    b1 = [p_ref[B1_OFF + j] for j in range(HID_F)]
    w2 = [p_ref[W2_OFF + j] for j in range(HID_F * OUT_F)]
    b2 = p_ref[B2_OFF]

    y = jnp.zeros_like(x0)
    # Unrolled over the 4 hidden units: pure VPU scalar*vector FMAs, no MXU.
    for j in range(HID_F):
        h = x0 * w1[0 * HID_F + j] + x1 * w1[1 * HID_F + j] + b1[j]
        h = jnp.maximum(h, 0.0)         # ReLU
        y = y + h * w2[j * OUT_F + 0]
    y = y + b2

    o_ref[...] = y.astype(o_ref.dtype)


@jax.jit
def simple_module_forward(x, w1, b1, w2, b2):
    """x: (B, IN_F); w1: (IN_F, HID_F); b1: (HID_F,); w2: (HID_F, OUT_F); b2: (OUT_F,)."""
    B = x.shape[0]

    # Pack the 17 parameter floats into one padded SMEM vector (single operand,
    # single tiny DMA).
    params = jnp.concatenate(
        [w1.reshape(-1), b1.reshape(-1), w2.reshape(-1), b2.reshape(-1)])
    params = jnp.pad(params, (0, PARAMS_PADDED - N_PARAMS)).astype(jnp.float32)

    flops = B * (2 * IN_F * HID_F + HID_F + 2 * HID_F * OUT_F + OUT_F)
    bytes_accessed = 4 * (B * IN_F + B * OUT_F + PARAMS_PADDED)

    out = pl.pallas_call(
        mlp_kernel,
        out_shape=jax.ShapeDtypeStruct((B, OUT_F), x.dtype),
        in_specs=[
            pl.BlockSpec(memory_space=pltpu.MemorySpace.VMEM),   # x (natural layout)
            pl.BlockSpec(memory_space=pltpu.MemorySpace.SMEM),   # packed params
        ],
        out_specs=pl.BlockSpec(memory_space=pltpu.MemorySpace.VMEM),
        cost_estimate=pl.CostEstimate(
            flops=flops, transcendentals=0, bytes_accessed=bytes_accessed),
    )(x, params)

    # TODO(synk): only if BATCH grows to >= ~2-4K, add a batch grid axis marked
    # "parallel" (per-core lane block a multiple of 128) so both v7x TensorCores
    # get work, and reshape to (B//8, 8*...) style blocks to fill full 8x128
    # vregs; at B=256 grid-step overhead (~0.35 us) would exceed the compute.
    return out                                           # (B, OUT_F)


def init_params(key):
    # Deterministic init mimicking nn.Linear's uniform(-1/sqrt(fan_in), 1/sqrt(fan_in)).
    k1, k2, k3, k4 = jax.random.split(key, 4)
    bound1 = 1.0 / jnp.sqrt(IN_F)
    bound2 = 1.0 / jnp.sqrt(HID_F)
    w1 = jax.random.uniform(k1, (IN_F, HID_F), jnp.float32, -bound1, bound1)
    b1 = jax.random.uniform(k2, (HID_F,), jnp.float32, -bound1, bound1)
    w2 = jax.random.uniform(k3, (HID_F, OUT_F), jnp.float32, -bound2, bound2)
    b2 = jax.random.uniform(k4, (OUT_F,), jnp.float32, -bound2, bound2)
    return w1, b1, w2, b2


if __name__ == "__main__":
    key = jax.random.PRNGKey(0)
    k_x, k_p = jax.random.split(key)
    x = jax.random.normal(k_x, (BATCH, IN_F), jnp.float32)
    w1, b1, w2, b2 = init_params(k_p)

    out = simple_module_forward(x, w1, b1, w2, b2)
    out = jax.block_until_ready(out)

    # Pure-JAX reference check
    ref = jnp.maximum(x @ w1 + b1, 0.0) @ w2 + b2
    assert out.shape == (BATCH, OUT_F)
    assert jnp.allclose(out, ref, atol=1e-5, rtol=1e-5)

    print("KERNEL_OK")
</pallas_src>

<mosaic_0001>
module attributes {stable_mosaic.version = 11 : i64} {
  func.func @mlp_kernel(%arg0: memref<256x2xf32, #tpu.memory_space<vmem>>, %arg1: memref<32xf32, #tpu.memory_space<smem>>, %arg2: memref<256x1xf32, #tpu.memory_space<vmem>>) attributes {dimension_semantics = [], scalar_prefetch = 0 : i64, scratch_operands = 0 : i64, tpu.core_type = #tpu.core_type<tc>} {
    %c0 = arith.constant 0 : index
    %c0_0 = arith.constant 0 : index
    %0 = vector.load %arg0[%c0, %c0_0] : memref<256x2xf32, #tpu.memory_space<vmem>>, vector<256x2xf32>
    %1 = vector.extract_strided_slice %0 {offsets = [0, 0], sizes = [256, 1], strides = [1, 1]} : vector<256x2xf32> to vector<256x1xf32>
    %2 = vector.extract_strided_slice %0 {offsets = [0, 1], sizes = [256, 1], strides = [1, 1]} : vector<256x2xf32> to vector<256x1xf32>
    %c0_1 = arith.constant 0 : index
    %3 = memref.load %arg1[%c0_1] : memref<32xf32, #tpu.memory_space<smem>>
    %c1 = arith.constant 1 : index
    %4 = memref.load %arg1[%c1] : memref<32xf32, #tpu.memory_space<smem>>
    %c2 = arith.constant 2 : index
    %5 = memref.load %arg1[%c2] : memref<32xf32, #tpu.memory_space<smem>>
    %c3 = arith.constant 3 : index
    %6 = memref.load %arg1[%c3] : memref<32xf32, #tpu.memory_space<smem>>
    %c4 = arith.constant 4 : index
    %7 = memref.load %arg1[%c4] : memref<32xf32, #tpu.memory_space<smem>>
    %c5 = arith.constant 5 : index
    %8 = memref.load %arg1[%c5] : memref<32xf32, #tpu.memory_space<smem>>
    %c6 = arith.constant 6 : index
    %9 = memref.load %arg1[%c6] : memref<32xf32, #tpu.memory_space<smem>>
    %c7 = arith.constant 7 : index
    %10 = memref.load %arg1[%c7] : memref<32xf32, #tpu.memory_space<smem>>
    %c8 = arith.constant 8 : index
    %11 = memref.load %arg1[%c8] : memref<32xf32, #tpu.memory_space<smem>>
    %c9 = arith.constant 9 : index
    %12 = memref.load %arg1[%c9] : memref<32xf32, #tpu.memory_space<smem>>
    %c10 = arith.constant 10 : index
    %13 = memref.load %arg1[%c10] : memref<32xf32, #tpu.memory_space<smem>>
    %c11 = arith.constant 11 : index
    %14 = memref.load %arg1[%c11] : memref<32xf32, #tpu.memory_space<smem>>
    %c12 = arith.constant 12 : index
    %15 = memref.load %arg1[%c12] : memref<32xf32, #tpu.memory_space<smem>>
    %c13 = arith.constant 13 : index
    %16 = memref.load %arg1[%c13] : memref<32xf32, #tpu.memory_space<smem>>
    %c14 = arith.constant 14 : index
    %17 = memref.load %arg1[%c14] : memref<32xf32, #tpu.memory_space<smem>>
    %c15 = arith.constant 15 : index
    %18 = memref.load %arg1[%c15] : memref<32xf32, #tpu.memory_space<smem>>
    %c16 = arith.constant 16 : index
    %19 = memref.load %arg1[%c16] : memref<32xf32, #tpu.memory_space<smem>>
    %cst = arith.constant 0.000000e+00 : f32
    %20 = vector.broadcast %cst : f32 to vector<256x1xf32>
    %21 = vector.broadcast %3 : f32 to vector<256x1xf32>
    %22 = arith.mulf %1, %21 : vector<256x1xf32>
    %23 = vector.broadcast %7 : f32 to vector<256x1xf32>
    %24 = arith.mulf %2, %23 : vector<256x1xf32>
    %25 = arith.addf %22, %24 : vector<256x1xf32>
    %26 = vector.broadcast %11 : f32 to vector<256x1xf32>
    %27 = arith.addf %25, %26 : vector<256x1xf32>
    %cst_2 = arith.constant 0.000000e+00 : f32
    %28 = vector.broadcast %cst_2 : f32 to vector<256x1xf32>
    %29 = arith.maximumf %27, %28 : vector<256x1xf32>
    %30 = vector.broadcast %15 : f32 to vector<256x1xf32>
    %31 = arith.mulf %29, %30 : vector<256x1xf32>
    %32 = arith.addf %20, %31 : vector<256x1xf32>
    %33 = vector.broadcast %4 : f32 to vector<256x1xf32>
    %34 = arith.mulf %1, %33 : vector<256x1xf32>
    %35 = vector.broadcast %8 : f32 to vector<256x1xf32>
    %36 = arith.mulf %2, %35 : vector<256x1xf32>
    %37 = arith.addf %34, %36 : vector<256x1xf32>
    %38 = vector.broadcast %12 : f32 to vector<256x1xf32>
    %39 = arith.addf %37, %38 : vector<256x1xf32>
    %cst_3 = arith.constant 0.000000e+00 : f32
    %40 = vector.broadcast %cst_3 : f32 to vector<256x1xf32>
    %41 = arith.maximumf %39, %40 : vector<256x1xf32>
    %42 = vector.broadcast %16 : f32 to vector<256x1xf32>
    %43 = arith.mulf %41, %42 : vector<256x1xf32>
    %44 = arith.addf %32, %43 : vector<256x1xf32>
    %45 = vector.broadcast %5 : f32 to vector<256x1xf32>
    %46 = arith.mulf %1, %45 : vector<256x1xf32>
    %47 = vector.broadcast %9 : f32 to vector<256x1xf32>
    %48 = arith.mulf %2, %47 : vector<256x1xf32>
    %49 = arith.addf %46, %48 : vector<256x1xf32>
    %50 = vector.broadcast %13 : f32 to vector<256x1xf32>
    %51 = arith.addf %49, %50 : vector<256x1xf32>
    %cst_4 = arith.constant 0.000000e+00 : f32
    %52 = vector.broadcast %cst_4 : f32 to vector<256x1xf32>
    %53 = arith.maximumf %51, %52 : vector<256x1xf32>
    %54 = vector.broadcast %17 : f32 to vector<256x1xf32>
    %55 = arith.mulf %53, %54 : vector<256x1xf32>
    %56 = arith.addf %44, %55 : vector<256x1xf32>
    %57 = vector.broadcast %6 : f32 to vector<256x1xf32>
    %58 = arith.mulf %1, %57 : vector<256x1xf32>
    %59 = vector.broadcast %10 : f32 to vector<256x1xf32>
    %60 = arith.mulf %2, %59 : vector<256x1xf32>
    %61 = arith.addf %58, %60 : vector<256x1xf32>
    %62 = vector.broadcast %14 : f32 to vector<256x1xf32>
    %63 = arith.addf %61, %62 : vector<256x1xf32>
    %cst_5 = arith.constant 0.000000e+00 : f32
    %64 = vector.broadcast %cst_5 : f32 to vector<256x1xf32>
    %65 = arith.maximumf %63, %64 : vector<256x1xf32>
    %66 = vector.broadcast %18 : f32 to vector<256x1xf32>
    %67 = arith.mulf %65, %66 : vector<256x1xf32>
    %68 = arith.addf %56, %67 : vector<256x1xf32>
    %69 = vector.broadcast %19 : f32 to vector<256x1xf32>
    %70 = arith.addf %68, %69 : vector<256x1xf32>
    %c0_6 = arith.constant 0 : index
    %c0_7 = arith.constant 0 : index
    %71 = vector.load %arg2[%c0_6, %c0_7] : memref<256x1xf32, #tpu.memory_space<vmem>>, vector<256x1xf32>
    tpu.vector_store %arg2[%c0_6, %c0_7], %70 {strides = array<i32>} : memref<256x1xf32, #tpu.memory_space<vmem>>, vector<256x1xf32>,
    return
  }
}

</mosaic_0001>

<llo_original>
// kernel: simple_module_forward.1
$region0: #{simple_module_forward.1}
  #allocation0 [shape = 'u32[]', space=smem, size = 0x4, offset = 0x4, fixed_abs, tag = 'smem constant byte address 0x4 - core index']
  #allocation1 [shape = 'u32[72,128]{1,0:T(1,128)}', space=vmem, size = 0x9000, scoped, tag = 'internal scratch']
  %s0 = inlined_call_operand.vmem [shape: f32[256,2], index: 0, kind: input, shape index: {}]
  %s1 = inlined_call_operand.vmem [shape: f32[32], index: 1, kind: input, shape index: {}]
  %s2 = inlined_call_operand.vmem [shape: f32[256,1], index: 2, kind: output, shape index: {}]
  %s3 = sld [smem:[#allocation0]]
  $region22: #{simple_module_forward.1} parent=0
    _
  %s5 = ssub.s32 1, %s3
  %s6 = scalar_select 0, %s5, %s3
  $region1: #{simple_module_forward.1} parent=0
    #allocation2 [shape = 'u8[512]{0}', space=smem, size = 0x200, scoped, tag = 'input window, operand 1, single buffered']
    #allocation3 [shape = 's32[1]{0}', space=sflag, size = 0x4, scoped, tag = 'scoped memory for simple_module_forward.1']
    %7 = vsyncpa [#allocation3], 0
    // Predicated region
    $region2: #{simple_module_forward.1} parent=1 // pred_check
      _
    $region3: #{simple_module_forward.1} parent=1 // pred_check_branch
      %9 = sbr.rel (0) target = $region5
    $region4: #{simple_module_forward.1} parent=1 // pred_region
      _
    $region5: #{simple_module_forward.1} parent=1 // pred_fallthru
      _
    // Predicated region
    $region6: #{simple_module_forward.1} parent=1 // pred_check
      _
    $region7: #{simple_module_forward.1} parent=1 // pred_check_branch
      %11 = sbr.rel (0) target = $region9
    $region8: #{simple_module_forward.1} parent=1 // pred_region
      %13 = vsyncadd [#allocation3], 0
      %s15 = sshll.u32 %s1, 4
      %s16 = int_to_ptr.vmem [resolvable:$true] %s15
      %18 = dma.vmem_to_smem %s16, 16, [#allocation2], [#allocation3]
    $region9: #{simple_module_forward.1} parent=1 // pred_fallthru
      _
    // Predicated region
    $region10: #{simple_module_forward.1} parent=1 // pred_check
      _
    $region11: #{simple_module_forward.1} parent=1 // pred_check_branch
      %20 = sbr.rel (0) target = $region13
    $region12: #{simple_module_forward.1} parent=1 // pred_region
      %22 = dma.done [#allocation3], 16
    $region13: #{simple_module_forward.1} parent=1 // pred_fallthru
      _
    %23 = sfence
    %v24 = vld [vmem:[%s0] sm:$0xff]
    %v25 = vld [vmem:[%s0 + $0x8] sm:$0xff]
    %v26 = vld [vmem:[%s0 + $0x10] sm:$0xff]
    %v27 = vld [vmem:[%s0 + $0x18] sm:$0xff]
    %v28 = vld [vmem:[%s0 + $0x20] sm:$0xff]
    %v29 = vld [vmem:[%s0 + $0x28] sm:$0xff]
    %v30 = vld [vmem:[%s0 + $0x30] sm:$0xff]
    %v31 = vld [vmem:[%s0 + $0x38] sm:$0xff]
    %v32 = vld [vmem:[%s0 + $0x40] sm:$0xff]
    %v33 = vld [vmem:[%s0 + $0x48] sm:$0xff]
    %v34 = vld [vmem:[%s0 + $0x50] sm:$0xff]
    %v35 = vld [vmem:[%s0 + $0x58] sm:$0xff]
    %v36 = vld [vmem:[%s0 + $0x60] sm:$0xff]
    %v37 = vld [vmem:[%s0 + $0x68] sm:$0xff]
    %v38 = vld [vmem:[%s0 + $0x70] sm:$0xff]
    %v39 = vld [vmem:[%s0 + $0x78] sm:$0xff]
    %v40 = vld [vmem:[%s0 + $0x80] sm:$0xff]
    %v41 = vld [vmem:[%s0 + $0x88] sm:$0xff]
    %v42 = vld [vmem:[%s0 + $0x90] sm:$0xff]
    %v43 = vld [vmem:[%s0 + $0x98] sm:$0xff]
    %v44 = vld [vmem:[%s0 + $0xa0] sm:$0xff]
    %v45 = vld [vmem:[%s0 + $0xa8] sm:$0xff]
    %v46 = vld [vmem:[%s0 + $0xb0] sm:$0xff]
    %v47 = vld [vmem:[%s0 + $0xb8] sm:$0xff]
    %v48 = vld [vmem:[%s0 + $0xc0] sm:$0xff]
    %v49 = vld [vmem:[%s0 + $0xc8] sm:$0xff]
    %v50 = vld [vmem:[%s0 + $0xd0] sm:$0xff]
    %v51 = vld [vmem:[%s0 + $0xd8] sm:$0xff]
    %v52 = vld [vmem:[%s0 + $0xe0] sm:$0xff]
    %v53 = vld [vmem:[%s0 + $0xe8] sm:$0xff]
    %v54 = vld [vmem:[%s0 + $0xf0] sm:$0xff]
    %v55 = vld [vmem:[%s0 + $0xf8] sm:$0xff]
    %s56 = sld [smem:[#allocation2]]
    %s57 = sld [smem:[#allocation2 + $0x1]]
    %s58 = sld [smem:[#allocation2 + $0x2]]
    %s59 = sld [smem:[#allocation2 + $0x3]]
    %s60 = sld [smem:[#allocation2 + $0x4]]
    %s61 = sld [smem:[#allocation2 + $0x5]]
    %s62 = sld [smem:[#allocation2 + $0x6]]
    %s63 = sld [smem:[#allocation2 + $0x7]]
    %s64 = sld [smem:[#allocation2 + $0x8]]
    %s65 = sld [smem:[#allocation2 + $0x9]]
    %s66 = sld [smem:[#allocation2 + $0xa]]
    %s67 = sld [smem:[#allocation2 + $0xb]]
    %s68 = sld [smem:[#allocation2 + $0xc]]
    %s69 = sld [smem:[#allocation2 + $0xd]]
    %s70 = sld [smem:[#allocation2 + $0xe]]
    %s71 = sld [smem:[#allocation2 + $0xf]]
    %s72 = sld [smem:[#allocation2 + $0x10]]
    %v73 = vstv %s56
    %v74 = vmul.f32 %v24, %v73
    %v75 = vmul.f32 %v25, %v73
    %v76 = vmul.f32 %v26, %v73
    %v77 = vmul.f32 %v27, %v73
    %v78 = vmul.f32 %v28, %v73
    %v79 = vmul.f32 %v29, %v73
    %v80 = vmul.f32 %v30, %v73
    %v81 = vmul.f32 %v31, %v73
    %v82 = vmul.f32 %v32, %v73
    %v83 = vmul.f32 %v33, %v73
    %v84 = vmul.f32 %v34, %v73
    %v85 = vmul.f32 %v35, %v73
    %v86 = vmul.f32 %v36, %v73
    %v87 = vmul.f32 %v37, %v73
    %v88 = vmul.f32 %v38, %v73
    %v89 = vmul.f32 %v39, %v73
    %v90 = vmul.f32 %v40, %v73
    %v91 = vmul.f32 %v41, %v73
    %v92 = vmul.f32 %v42, %v73
    %v93 = vmul.f32 %v43, %v73
    %v94 = vmul.f32 %v44, %v73
    %v95 = vmul.f32 %v45, %v73
    %v96 = vmul.f32 %v46, %v73
    %v97 = vmul.f32 %v47, %v73
    %v98 = vmul.f32 %v48, %v73
    %v99 = vmul.f32 %v49, %v73
    %v100 = vmul.f32 %v50, %v73
    %v101 = vmul.f32 %v51, %v73
    %v102 = vmul.f32 %v52, %v73
    %v103 = vmul.f32 %v53, %v73
    %v104 = vmul.f32 %v54, %v73
    %v105 = vmul.f32 %v55, %v73
    %v106 = vstv %s60
    %v107 = vmul.f32 %v24, %v106
    %v108 = vmul.f32 %v25, %v106
    %v109 = vmul.f32 %v26, %v106
    %v110 = vmul.f32 %v27, %v106
    %v111 = vmul.f32 %v28, %v106
    %v112 = vmul.f32 %v29, %v106
    %v113 = vmul.f32 %v30, %v106
    %v114 = vmul.f32 %v31, %v106
    %v115 = vmul.f32 %v32, %v106
    %v116 = vmul.f32 %v33, %v106
    %v117 = vmul.f32 %v34, %v106
    %v118 = vmul.f32 %v35, %v106
    %v119 = vmul.f32 %v36, %v106
    %v120 = vmul.f32 %v37, %v106
    %v121 = vmul.f32 %v38, %v106
    %v122 = vmul.f32 %v39, %v106
    %v123 = vmul.f32 %v40, %v106
    %v124 = vmul.f32 %v41, %v106
    %v125 = vmul.f32 %v42, %v106
    %v126 = vmul.f32 %v43, %v106
    %v127 = vmul.f32 %v44, %v106
    %v128 = vmul.f32 %v45, %v106
    %v129 = vmul.f32 %v46, %v106
    %v130 = vmul.f32 %v47, %v106
    %v131 = vmul.f32 %v48, %v106
    %v132 = vmul.f32 %v49, %v106
    %v133 = vmul.f32 %v50, %v106
    %v134 = vmul.f32 %v51, %v106
    %v135 = vmul.f32 %v52, %v106
    %v136 = vmul.f32 %v53, %v106
    %v137 = vmul.f32 %v54, %v106
    %v138 = vmul.f32 %v55, %v106
    %171 = vrot.lane.b32.xlu0 %v107, 127
    %v172 = vpop.permute.xlu0 %171
    %173 = vrot.lane.b32.xlu0 %v108, 127
    %v174 = vpop.permute.xlu0 %173
    %175 = vrot.lane.b32.xlu0 %v109, 127
    %v176 = vpop.permute.xlu0 %175
    %177 = vrot.lane.b32.xlu0 %v110, 127
    %v178 = vpop.permute.xlu0 %177
    %179 = vrot.lane.b32.xlu0 %v111, 127
    %v180 = vpop.permute.xlu0 %179
    %181 = vrot.lane.b32.xlu0 %v112, 127
    %v182 = vpop.permute.xlu0 %181
    %183 = vrot.lane.b32.xlu0 %v113, 127
    %v184 = vpop.permute.xlu0 %183
    %185 = vrot.lane.b32.xlu0 %v114, 127
    %v186 = vpop.permute.xlu0 %185
    %187 = vrot.lane.b32.xlu0 %v115, 127
    %v188 = vpop.permute.xlu0 %187
    %189 = vrot.lane.b32.xlu0 %v116, 127
    %v190 = vpop.permute.xlu0 %189
    %191 = vrot.lane.b32.xlu0 %v117, 127
    %v192 = vpop.permute.xlu0 %191
    %193 = vrot.lane.b32.xlu0 %v118, 127
    %v194 = vpop.permute.xlu0 %193
    %195 = vrot.lane.b32.xlu0 %v119, 127
    %v196 = vpop.permute.xlu0 %195
    %197 = vrot.lane.b32.xlu0 %v120, 127
    %v198 = vpop.permute.xlu0 %197
    %199 = vrot.lane.b32.xlu0 %v121, 127
    %v200 = vpop.permute.xlu0 %199
    %201 = vrot.lane.b32.xlu0 %v122, 127
    %v202 = vpop.permute.xlu0 %201
    %203 = vrot.lane.b32.xlu0 %v123, 127
    %v204 = vpop.permute.xlu0 %203
    %205 = vrot.lane.b32.xlu0 %v124, 127
    %v206 = vpop.permute.xlu0 %205
    %207 = vrot.lane.b32.xlu0 %v125, 127
    %v208 = vpop.permute.xlu0 %207
    %209 = vrot.lane.b32.xlu0 %v126, 127
    %v210 = vpop.permute.xlu0 %209
    %211 = vrot.lane.b32.xlu0 %v127, 127
    %v212 = vpop.permute.xlu0 %211
    %213 = vrot.lane.b32.xlu0 %v128, 127
    %v214 = vpop.permute.xlu0 %213
    %215 = vrot.lane.b32.xlu0 %v129, 127
    %v216 = vpop.permute.xlu0 %215
    %217 = vrot.lane.b32.xlu0 %v130, 127
    %v218 = vpop.permute.xlu0 %217
    %219 = vrot.lane.b32.xlu0 %v131, 127
    %v220 = vpop.permute.xlu0 %219
    %221 = vrot.lane.b32.xlu0 %v132, 127
    %v222 = vpop.permute.xlu0 %221
    %223 = vrot.lane.b32.xlu0 %v133, 127
    %v224 = vpop.permute.xlu0 %223
    %225 = vrot.lane.b32.xlu0 %v134, 127
    %v226 = vpop.permute.xlu0 %225
    %227 = vrot.lane.b32.xlu0 %v135, 127
    %v228 = vpop.permute.xlu0 %227
    %229 = vrot.lane.b32.xlu0 %v136, 127
    %v230 = vpop.permute.xlu0 %229
    %231 = vrot.lane.b32.xlu0 %v137, 127
    %v232 = vpop.permute.xlu0 %231
    %233 = vrot.lane.b32.xlu0 %v138, 127
    %v234 = vpop.permute.xlu0 %233
    %v267 = vadd.f32 %v74, %v172
    %v268 = vadd.f32 %v75, %v174
    %v269 = vadd.f32 %v76, %v176
    %v270 = vadd.f32 %v77, %v178
    %v271 = vadd.f32 %v78, %v180
    %v272 = vadd.f32 %v79, %v182
    %v273 = vadd.f32 %v80, %v184
    %v274 = vadd.f32 %v81, %v186
    %v275 = vadd.f32 %v82, %v188
    %v276 = vadd.f32 %v83, %v190
    %v277 = vadd.f32 %v84, %v192
    %v278 = vadd.f32 %v85, %v194
    %v279 = vadd.f32 %v86, %v196
    %v280 = vadd.f32 %v87, %v198
    %v281 = vadd.f32 %v88, %v200
    %v282 = vadd.f32 %v89, %v202
    %v283 = vadd.f32 %v90, %v204
    %v284 = vadd.f32 %v91, %v206
    %v285 = vadd.f32 %v92, %v208
    %v286 = vadd.f32 %v93, %v210
    %v287 = vadd.f32 %v94, %v212
    %v288 = vadd.f32 %v95, %v214
    %v289 = vadd.f32 %v96, %v216
    %v290 = vadd.f32 %v97, %v218
    %v291 = vadd.f32 %v98, %v220
    %v292 = vadd.f32 %v99, %v222
    %v293 = vadd.f32 %v100, %v224
    %v294 = vadd.f32 %v101, %v226
    %v295 = vadd.f32 %v102, %v228
    %v296 = vadd.f32 %v103, %v230
    %v297 = vadd.f32 %v104, %v232
    %v298 = vadd.f32 %v105, %v234
    %v299 = vstv %s64
    %v300 = vadd.f32 %v267, %v299
    %v301 = vadd.f32 %v268, %v299
    %v302 = vadd.f32 %v269, %v299
    %v303 = vadd.f32 %v270, %v299
    %v304 = vadd.f32 %v271, %v299
    %v305 = vadd.f32 %v272, %v299
    %v306 = vadd.f32 %v273, %v299
    %v307 = vadd.f32 %v274, %v299
    %v308 = vadd.f32 %v275, %v299
    %v309 = vadd.f32 %v276, %v299
    %v310 = vadd.f32 %v277, %v299
    %v311 = vadd.f32 %v278, %v299
    %v312 = vadd.f32 %v279, %v299
    %v313 = vadd.f32 %v280, %v299
    %v314 = vadd.f32 %v281, %v299
    %v315 = vadd.f32 %v282, %v299
    %v316 = vadd.f32 %v283, %v299
    %v317 = vadd.f32 %v284, %v299
    %v318 = vadd.f32 %v285, %v299
    %v319 = vadd.f32 %v286, %v299
    %v320 = vadd.f32 %v287, %v299
    %v321 = vadd.f32 %v288, %v299
    %v322 = vadd.f32 %v289, %v299
    %v323 = vadd.f32 %v290, %v299
    %v324 = vadd.f32 %v291, %v299
    %v325 = vadd.f32 %v292, %v299
    %v326 = vadd.f32 %v293, %v299
    %v327 = vadd.f32 %v294, %v299
    %v328 = vadd.f32 %v295, %v299
    %v329 = vadd.f32 %v296, %v299
    %v330 = vadd.f32 %v297, %v299
    %v331 = vadd.f32 %v298, %v299
    %v332 = vmax.f32 %v300, 0.0
    %v333 = vmax.f32 %v301, 0.0
    %v334 = vmax.f32 %v302, 0.0
    %v335 = vmax.f32 %v303, 0.0
    %v336 = vmax.f32 %v304, 0.0
    %v337 = vmax.f32 %v305, 0.0
    %v338 = vmax.f32 %v306, 0.0
    %v339 = vmax.f32 %v307, 0.0
    %v340 = vmax.f32 %v308, 0.0
    %v341 = vmax.f32 %v309, 0.0
    %v342 = vmax.f32 %v310, 0.0
    %v343 = vmax.f32 %v311, 0.0
    %v344 = vmax.f32 %v312, 0.0
    %v345 = vmax.f32 %v313, 0.0
    %v346 = vmax.f32 %v314, 0.0
    %v347 = vmax.f32 %v315, 0.0
    %v348 = vmax.f32 %v316, 0.0
    %v349 = vmax.f32 %v317, 0.0
    %v350 = vmax.f32 %v318, 0.0
    %v351 = vmax.f32 %v319, 0.0
    %v352 = vmax.f32 %v320, 0.0
    %v353 = vmax.f32 %v321, 0.0
    %v354 = vmax.f32 %v322, 0.0
    %v355 = vmax.f32 %v323, 0.0
    %v356 = vmax.f32 %v324, 0.0
    %v357 = vmax.f32 %v325, 0.0
    %v358 = vmax.f32 %v326, 0.0
    %v359 = vmax.f32 %v327, 0.0
    %v360 = vmax.f32 %v328, 0.0
    %v361 = vmax.f32 %v329, 0.0
    %v362 = vmax.f32 %v330, 0.0
    %v363 = vmax.f32 %v331, 0.0
    %v364 = vstv %s68
    %v365 = vmul.f32 %v332, %v364
    %v366 = vmul.f32 %v333, %v364
    %v367 = vmul.f32 %v334, %v364
    %v368 = vmul.f32 %v335, %v364
    %v369 = vmul.f32 %v336, %v364
    %v370 = vmul.f32 %v337, %v364
    %v371 = vmul.f32 %v338, %v364
    %v372 = vmul.f32 %v339, %v364
    %v373 = vmul.f32 %v340, %v364
    %v374 = vmul.f32 %v341, %v364
    %v375 = vmul.f32 %v342, %v364
    %v376 = vmul.f32 %v343, %v364
    %v377 = vmul.f32 %v344, %v364
    %v378 = vmul.f32 %v345, %v364
    %v379 = vmul.f32 %v346, %v364
    %v380 = vmul.f32 %v347, %v364
    %v381 = vmul.f32 %v348, %v364
    %v382 = vmul.f32 %v349, %v364
    %v383 = vmul.f32 %v350, %v364
    %v384 = vmul.f32 %v351, %v364
    %v385 = vmul.f32 %v352, %v364
    %v386 = vmul.f32 %v353, %v364
    %v387 = vmul.f32 %v354, %v364
    %v388 = vmul.f32 %v355, %v364
    %v389 = vmul.f32 %v356, %v364
    %v390 = vmul.f32 %v357, %v364
    %v391 = vmul.f32 %v358, %v364
    %v392 = vmul.f32 %v359, %v364
    %v393 = vmul.f32 %v360, %v364
    %v394 = vmul.f32 %v361, %v364
    %v395 = vmul.f32 %v362, %v364
    %v396 = vmul.f32 %v363, %v364
    %v397 = vadd.f32 %v365, 0.0
    %v398 = vadd.f32 %v366, 0.0
    %v399 = vadd.f32 %v367, 0.0
    %v400 = vadd.f32 %v368, 0.0
    %v401 = vadd.f32 %v369, 0.0
    %v402 = vadd.f32 %v370, 0.0
    %v403 = vadd.f32 %v371, 0.0
    %v404 = vadd.f32 %v372, 0.0
    %v405 = vadd.f32 %v373, 0.0
    %v406 = vadd.f32 %v374, 0.0
    %v407 = vadd.f32 %v375, 0.0
    %v408 = vadd.f32 %v376, 0.0
    %v409 = vadd.f32 %v377, 0.0
    %v410 = vadd.f32 %v378, 0.0
    %v411 = vadd.f32 %v379, 0.0
    %v412 = vadd.f32 %v380, 0.0
    %v413 = vadd.f32 %v381, 0.0
    %v414 = vadd.f32 %v382, 0.0
    %v415 = vadd.f32 %v383, 0.0
    %v416 = vadd.f32 %v384, 0.0
    %v417 = vadd.f32 %v385, 0.0
    %v418 = vadd.f32 %v386, 0.0
    %v419 = vadd.f32 %v387, 0.0
    %v420 = vadd.f32 %v388, 0.0
    %v421 = vadd.f32 %v389, 0.0
    %v422 = vadd.f32 %v390, 0.0
    %v423 = vadd.f32 %v391, 0.0
    %v424 = vadd.f32 %v392, 0.0
    %v425 = vadd.f32 %v393, 0.0
    %v426 = vadd.f32 %v394, 0.0
    %v427 = vadd.f32 %v395, 0.0
    %v428 = vadd.f32 %v396, 0.0
    %v429 = vstv %s57
    %v430 = vmul.f32 %v24, %v429
    %v431 = vmul.f32 %v25, %v429
    %v432 = vmul.f32 %v26, %v429
    %v433 = vmul.f32 %v27, %v429
    %v434 = vmul.f32 %v28, %v429
    %v435 = vmul.f32 %v29, %v429
    %v436 = vmul.f32 %v30, %v429
    %v437 = vmul.f32 %v31, %v429
    %v438 = vmul.f32 %v32, %v429
    %v439 = vmul.f32 %v33, %v429
    %v440 = vmul.f32 %v34, %v429
    %v441 = vmul.f32 %v35, %v429
    %v442 = vmul.f32 %v36, %v429
    %v443 = vmul.f32 %v37, %v429
    %v444 = vmul.f32 %v38, %v429
    %v445 = vmul.f32 %v39, %v429
    %v446 = vmul.f32 %v40, %v429
    %v447 = vmul.f32 %v41, %v429
    %v448 = vmul.f32 %v42, %v429
    %v449 = vmul.f32 %v43, %v429
    %v450 = vmul.f32 %v44, %v429
    %v451 = vmul.f32 %v45, %v429
    %v452 = vmul.f32 %v46, %v429
    %v453 = vmul.f32 %v47, %v429
    %v454 = vmul.f32 %v48, %v429
    %v455 = vmul.f32 %v49, %v429
    %v456 = vmul.f32 %v50, %v429
    %v457 = vmul.f32 %v51, %v429
    %v458 = vmul.f32 %v52, %v429
    %v459 = vmul.f32 %v53, %v429
    %v460 = vmul.f32 %v54, %v429
    %v461 = vmul.f32 %v55, %v429
    %v462 = vstv %s61
    %v463 = vmul.f32 %v24, %v462
    %v464 = vmul.f32 %v25, %v462
    %v465 = vmul.f32 %v26, %v462
    %v466 = vmul.f32 %v27, %v462
    %v467 = vmul.f32 %v28, %v462
    %v468 = vmul.f32 %v29, %v462
    %v469 = vmul.f32 %v30, %v462
    %v470 = vmul.f32 %v31, %v462
    %v471 = vmul.f32 %v32, %v462
    %v472 = vmul.f32 %v33, %v462
    %v473 = vmul.f32 %v34, %v462
    %v474 = vmul.f32 %v35, %v462
    %v475 = vmul.f32 %v36, %v462
    %v476 = vmul.f32 %v37, %v462
    %v477 = vmul.f32 %v38, %v462
    %v478 = vmul.f32 %v39, %v462
    %v479 = vmul.f32 %v40, %v462
    %v480 = vmul.f32 %v41, %v462
    %v481 = vmul.f32 %v42, %v462
    %v482 = vmul.f32 %v43, %v462
    %v483 = vmul.f32 %v44, %v462
    %v484 = vmul.f32 %v45, %v462
    %v485 = vmul.f32 %v46, %v462
    %v486 = vmul.f32 %v47, %v462
    %v487 = vmul.f32 %v48, %v462
    %v488 = vmul.f32 %v49, %v462
    %v489 = vmul.f32 %v50, %v462
    %v490 = vmul.f32 %v51, %v462
    %v491 = vmul.f32 %v52, %v462
    %v492 = vmul.f32 %v53, %v462
    %v493 = vmul.f32 %v54, %v462
    %v494 = vmul.f32 %v55, %v462
    %527 = vrot.lane.b32.xlu0 %v463, 127
    %v528 = vpop.permute.xlu0 %527
    %529 = vrot.lane.b32.xlu0 %v464, 127
    %v530 = vpop.permute.xlu0 %529
    %531 = vrot.lane.b32.xlu0 %v465, 127
    %v532 = vpop.permute.xlu0 %531
    %533 = vrot.lane.b32.xlu0 %v466, 127
    %v534 = vpop.permute.xlu0 %533
    %535 = vrot.lane.b32.xlu0 %v467, 127
    %v536 = vpop.permute.xlu0 %535
    %537 = vrot.lane.b32.xlu0 %v468, 127
    %v538 = vpop.permute.xlu0 %537
    %539 = vrot.lane.b32.xlu0 %v469, 127
    %v540 = vpop.permute.xlu0 %539
    %541 = vrot.lane.b32.xlu0 %v470, 127
    %v542 = vpop.permute.xlu0 %541
    %543 = vrot.lane.b32.xlu0 %v471, 127
    %v544 = vpop.permute.xlu0 %543
    %545 = vrot.lane.b32.xlu0 %v472, 127
    %v546 = vpop.permute.xlu0 %545
    %547 = vrot.lane.b32.xlu0 %v473, 127
    %v548 = vpop.permute.xlu0 %547
    %549 = vrot.lane.b32.xlu0 %v474, 127
    %v550 = vpop.permute.xlu0 %549
    %551 = vrot.lane.b32.xlu0 %v475, 127
    %v552 = vpop.permute.xlu0 %551
    %553 = vrot.lane.b32.xlu0 %v476, 127
    %v554 = vpop.permute.xlu0 %553
    %555 = vrot.lane.b32.xlu0 %v477, 127
    %v556 = vpop.permute.xlu0 %555
    %557 = vrot.lane.b32.xlu0 %v478, 127
    %v558 = vpop.permute.xlu0 %557
    %559 = vrot.lane.b32.xlu0 %v479, 127
    %v560 = vpop.permute.xlu0 %559
    %561 = vrot.lane.b32.xlu0 %v480, 127
    %v562 = vpop.permute.xlu0 %561
    %563 = vrot.lane.b32.xlu0 %v481, 127
    %v564 = vpop.permute.xlu0 %563
    %565 = vrot.lane.b32.xlu0 %v482, 127
    %v566 = vpop.permute.xlu0 %565
    %567 = vrot.lane.b32.xlu0 %v483, 127
    %v568 = vpop.permute.xlu0 %567
    %569 = vrot.lane.b32.xlu0 %v484, 127
    %v570 = vpop.permute.xlu0 %569
    %571 = vrot.lane.b32.xlu0 %v485, 127
    %v572 = vpop.permute.xlu0 %571
    %573 = vrot.lane.b32.xlu0 %v486, 127
    %v574 = vpop.permute.xlu0 %573
    %575 = vrot.lane.b32.xlu0 %v487, 127
    %v576 = vpop.permute.xlu0 %575
    %577 = vrot.lane.b32.xlu0 %v488, 127
    %v578 = vpop.permute.xlu0 %577
    %579 = vrot.lane.b32.xlu0 %v489, 127
    %v580 = vpop.permute.xlu0 %579
    %581 = vrot.lane.b32.xlu0 %v490, 127
    %v582 = vpop.permute.xlu0 %581
    %583 = vrot.lane.b32.xlu0 %v491, 127
    %v584 = vpop.permute.xlu0 %583
    %585 = vrot.lane.b32.xlu0 %v492, 127
    %v586 = vpop.permute.xlu0 %585
    %587 = vrot.lane.b32.xlu0 %v493, 127
    %v588 = vpop.permute.xlu0 %587
    %589 = vrot.lane.b32.xlu0 %v494, 127
    %v590 = vpop.permute.xlu0 %589
    %v623 = vadd.f32 %v430, %v528
    %v624 = vadd.f32 %v431, %v530
    %v625 = vadd.f32 %v432, %v532
    %v626 = vadd.f32 %v433, %v534
    %v627 = vadd.f32 %v434, %v536
    %v628 = vadd.f32 %v435, %v538
    %v629 = vadd.f32 %v436, %v540
    %v630 = vadd.f32 %v437, %v542
    %v631 = vadd.f32 %v438, %v544
    %v632 = vadd.f32 %v439, %v546
    %v633 = vadd.f32 %v440, %v548
    %v634 = vadd.f32 %v441, %v550
    %v635 = vadd.f32 %v442, %v552
    %v636 = vadd.f32 %v443, %v554
    %v637 = vadd.f32 %v444, %v556
    %v638 = vadd.f32 %v445, %v558
    %v639 = vadd.f32 %v446, %v560
    %v640 = vadd.f32 %v447, %v562
    %v641 = vadd.f32 %v448, %v564
    %v642 = vadd.f32 %v449, %v566
    %v643 = vadd.f32 %v450, %v568
    %v644 = vadd.f32 %v451, %v570
    %v645 = vadd.f32 %v452, %v572
    %v646 = vadd.f32 %v453, %v574
    %v647 = vadd.f32 %v454, %v576
    %v648 = vadd.f32 %v455, %v578
    %v649 = vadd.f32 %v456, %v580
    %v650 = vadd.f32 %v457, %v582
    %v651 = vadd.f32 %v458, %v584
    %v652 = vadd.f32 %v459, %v586
    %v653 = vadd.f32 %v460, %v588
    %v654 = vadd.f32 %v461, %v590
    %v655 = vstv %s65
    %v656 = vadd.f32 %v623, %v655
    %v657 = vadd.f32 %v624, %v655
    %v658 = vadd.f32 %v625, %v655
    %v659 = vadd.f32 %v626, %v655
    %v660 = vadd.f32 %v627, %v655
    %v661 = vadd.f32 %v628, %v655
    %v662 = vadd.f32 %v629, %v655
    %v663 = vadd.f32 %v630, %v655
    %v664 = vadd.f32 %v631, %v655
    %v665 = vadd.f32 %v632, %v655
    %v666 = vadd.f32 %v633, %v655
    %v667 = vadd.f32 %v634, %v655
    %v668 = vadd.f32 %v635, %v655
    %v669 = vadd.f32 %v636, %v655
    %v670 = vadd.f32 %v637, %v655
    %v671 = vadd.f32 %v638, %v655
    %v672 = vadd.f32 %v639, %v655
    %v673 = vadd.f32 %v640, %v655
    %v674 = vadd.f32 %v641, %v655
    %v675 = vadd.f32 %v642, %v655
    %v676 = vadd.f32 %v643, %v655
    %v677 = vadd.f32 %v644, %v655
    %v678 = vadd.f32 %v645, %v655
    %v679 = vadd.f32 %v646, %v655
    %v680 = vadd.f32 %v647, %v655
    %v681 = vadd.f32 %v648, %v655
    %v682 = vadd.f32 %v649, %v655
    %v683 = vadd.f32 %v650, %v655
    %v684 = vadd.f32 %v651, %v655
    %v685 = vadd.f32 %v652, %v655
    %v686 = vadd.f32 %v653, %v655
    %v687 = vadd.f32 %v654, %v655
    %v688 = vmax.f32 %v656, 0.0
    %v689 = vmax.f32 %v657, 0.0
    %v690 = vmax.f32 %v658, 0.0
    %v691 = vmax.f32 %v659, 0.0
    %v692 = vmax.f32 %v660, 0.0
    %v693 = vmax.f32 %v661, 0.0
    %v694 = vmax.f32 %v662, 0.0
    %v695 = vmax.f32 %v663, 0.0
    %v696 = vmax.f32 %v664, 0.0
    %v697 = vmax.f32 %v665, 0.0
    %v698 = vmax.f32 %v666, 0.0
    %v699 = vmax.f32 %v667, 0.0
    %v700 = vmax.f32 %v668, 0.0
    %v701 = vmax.f32 %v669, 0.0
    %v702 = vmax.f32 %v670, 0.0
    %v703 = vmax.f32 %v671, 0.0
    %v704 = vmax.f32 %v672, 0.0
    %v705 = vmax.f32 %v673, 0.0
    %v706 = vmax.f32 %v674, 0.0
    %v707 = vmax.f32 %v675, 0.0
    %v708 = vmax.f32 %v676, 0.0
    %v709 = vmax.f32 %v677, 0.0
    %v710 = vmax.f32 %v678, 0.0
    %v711 = vmax.f32 %v679, 0.0
    %v712 = vmax.f32 %v680, 0.0
    %v713 = vmax.f32 %v681, 0.0
    %v714 = vmax.f32 %v682, 0.0
    %v715 = vmax.f32 %v683, 0.0
    %v716 = vmax.f32 %v684, 0.0
    %v717 = vmax.f32 %v685, 0.0
    %v718 = vmax.f32 %v686, 0.0
    %v719 = vmax.f32 %v687, 0.0
    %v720 = vstv %s69
    %v721 = vmul.f32 %v688, %v720
    %v722 = vmul.f32 %v689, %v720
    %v723 = vmul.f32 %v690, %v720
    %v724 = vmul.f32 %v691, %v720
    %v725 = vmul.f32 %v692, %v720
    %v726 = vmul.f32 %v693, %v720
    %v727 = vmul.f32 %v694, %v720
    %v728 = vmul.f32 %v695, %v720
    %v729 = vmul.f32 %v696, %v720
    %v730 = vmul.f32 %v697, %v720
    %v731 = vmul.f32 %v698, %v720
    %v732 = vmul.f32 %v699, %v720
    %v733 = vmul.f32 %v700, %v720
    %v734 = vmul.f32 %v701, %v720
    %v735 = vmul.f32 %v702, %v720
    %v736 = vmul.f32 %v703, %v720
    %v737 = vmul.f32 %v704, %v720
    %v738 = vmul.f32 %v705, %v720
    %v739 = vmul.f32 %v706, %v720
    %v740 = vmul.f32 %v707, %v720
    %v741 = vmul.f32 %v708, %v720
    %v742 = vmul.f32 %v709, %v720
    %v743 = vmul.f32 %v710, %v720
    %v744 = vmul.f32 %v711, %v720
    %v745 = vmul.f32 %v712, %v720
    %v746 = vmul.f32 %v713, %v720
    %v747 = vmul.f32 %v714, %v720
    %v748 = vmul.f32 %v715, %v720
    %v749 = vmul.f32 %v716, %v720
    %v750 = vmul.f32 %v717, %v720
    %v751 = vmul.f32 %v718, %v720
    %v752 = vmul.f32 %v719, %v720
    %v753 = vadd.f32 %v397, %v721
    %v754 = vadd.f32 %v398, %v722
    %v755 = vadd.f32 %v399, %v723
    %v756 = vadd.f32 %v400, %v724
    %v757 = vadd.f32 %v401, %v725
    %v758 = vadd.f32 %v402, %v726
    %v759 = vadd.f32 %v403, %v727
    %v760 = vadd.f32 %v404, %v728
    %v761 = vadd.f32 %v405, %v729
    %v762 = vadd.f32 %v406, %v730
    %v763 = vadd.f32 %v407, %v731
    %v764 = vadd.f32 %v408, %v732
    %v765 = vadd.f32 %v409, %v733
    %v766 = vadd.f32 %v410, %v734
    %v767 = vadd.f32 %v411, %v735
    %v768 = vadd.f32 %v412, %v736
    %v769 = vadd.f32 %v413, %v737
    %v770 = vadd.f32 %v414, %v738
    %v771 = vadd.f32 %v415, %v739
    %v772 = vadd.f32 %v416, %v740
    %v773 = vadd.f32 %v417, %v741
    %v774 = vadd.f32 %v418, %v742
    %v775 = vadd.f32 %v419, %v743
    %v776 = vadd.f32 %v420, %v744
    %v777 = vadd.f32 %v421, %v745
    %v778 = vadd.f32 %v422, %v746
    %v779 = vadd.f32 %v423, %v747
    %v780 = vadd.f32 %v424, %v748
    %v781 = vadd.f32 %v425, %v749
    %v782 = vadd.f32 %v426, %v750
    %v783 = vadd.f32 %v427, %v751
    %v784 = vadd.f32 %v428, %v752
    %v785 = vstv %s58
    %v786 = vmul.f32 %v24, %v785
    %v787 = vmul.f32 %v25, %v785
    %v788 = vmul.f32 %v26, %v785
    %v789 = vmul.f32 %v27, %v785
    %v790 = vmul.f32 %v28, %v785
    %v791 = vmul.f32 %v29, %v785
    %v792 = vmul.f32 %v30, %v785
    %v793 = vmul.f32 %v31, %v785
    %v794 = vmul.f32 %v32, %v785
    %v795 = vmul.f32 %v33, %v785
    %v796 = vmul.f32 %v34, %v785
    %v797 = vmul.f32 %v35, %v785
    %v798 = vmul.f32 %v36, %v785
    %v799 = vmul.f32 %v37, %v785
    %v800 = vmul.f32 %v38, %v785
    %v801 = vmul.f32 %v39, %v785
    %v802 = vmul.f32 %v40, %v785
    %v803 = vmul.f32 %v41, %v785
    %v804 = vmul.f32 %v42, %v785
    %v805 = vmul.f32 %v43, %v785
    %v806 = vmul.f32 %v44, %v785
    %v807 = vmul.f32 %v45, %v785
    %v808 = vmul.f32 %v46, %v785
    %v809 = vmul.f32 %v47, %v785
    %v810 = vmul.f32 %v48, %v785
    %v811 = vmul.f32 %v49, %v785
    %v812 = vmul.f32 %v50, %v785
    %v813 = vmul.f32 %v51, %v785
    %v814 = vmul.f32 %v52, %v785
    %v815 = vmul.f32 %v53, %v785
    %v816 = vmul.f32 %v54, %v785
    %v817 = vmul.f32 %v55, %v785
    %v818 = vstv %s62
    %v819 = vmul.f32 %v24, %v818
    %v820 = vmul.f32 %v25, %v818
    %v821 = vmul.f32 %v26, %v818
    %v822 = vmul.f32 %v27, %v818
    %v823 = vmul.f32 %v28, %v818
    %v824 = vmul.f32 %v29, %v818
    %v825 = vmul.f32 %v30, %v818
    %v826 = vmul.f32 %v31, %v818
    %v827 = vmul.f32 %v32, %v818
    %v828 = vmul.f32 %v33, %v818
    %v829 = vmul.f32 %v34, %v818
    %v830 = vmul.f32 %v35, %v818
    %v831 = vmul.f32 %v36, %v818
    %v832 = vmul.f32 %v37, %v818
    %v833 = vmul.f32 %v38, %v818
    %v834 = vmul.f32 %v39, %v818
    %v835 = vmul.f32 %v40, %v818
    %v836 = vmul.f32 %v41, %v818
    %v837 = vmul.f32 %v42, %v818
    %v838 = vmul.f32 %v43, %v818
    %v839 = vmul.f32 %v44, %v818
    %v840 = vmul.f32 %v45, %v818
    %v841 = vmul.f32 %v46, %v818
    %v842 = vmul.f32 %v47, %v818
    %v843 = vmul.f32 %v48, %v818
    %v844 = vmul.f32 %v49, %v818
    %v845 = vmul.f32 %v50, %v818
    %v846 = vmul.f32 %v51, %v818
    %v847 = vmul.f32 %v52, %v818
    %v848 = vmul.f32 %v53, %v818
    %v849 = vmul.f32 %v54, %v818
    %v850 = vmul.f32 %v55, %v818
    %883 = vrot.lane.b32.xlu0 %v819, 127
    %v884 = vpop.permute.xlu0 %883
    %885 = vrot.lane.b32.xlu0 %v820, 127
    %v886 = vpop.permute.xlu0 %885
    %887 = vrot.lane.b32.xlu0 %v821, 127
    %v888 = vpop.permute.xlu0 %887
    %889 = vrot.lane.b32.xlu0 %v822, 127
    %v890 = vpop.permute.xlu0 %889
    %891 = vrot.lane.b32.xlu0 %v823, 127
    %v892 = vpop.permute.xlu0 %891
    %893 = vrot.lane.b32.xlu0 %v824, 127
    %v894 = vpop.permute.xlu0 %893
    %895 = vrot.lane.b32.xlu0 %v825, 127
    %v896 = vpop.permute.xlu0 %895
    %897 = vrot.lane.b32.xlu0 %v826, 127
    %v898 = vpop.permute.xlu0 %897
    %899 = vrot.lane.b32.xlu0 %v827, 127
    %v900 = vpop.permute.xlu0 %899
    %901 = vrot.lane.b32.xlu0 %v828, 127
    %v902 = vpop.permute.xlu0 %901
    %903 = vrot.lane.b32.xlu0 %v829, 127
    %v904 = vpop.permute.xlu0 %903
    %905 = vrot.lane.b32.xlu0 %v830, 127
    %v906 = vpop.permute.xlu0 %905
    %907 = vrot.lane.b32.xlu0 %v831, 127
    %v908 = vpop.permute.xlu0 %907
    %909 = vrot.lane.b32.xlu0 %v832, 127
    %v910 = vpop.permute.xlu0 %909
    %911 = vrot.lane.b32.xlu0 %v833, 127
    %v912 = vpop.permute.xlu0 %911
    %913 = vrot.lane.b32.xlu0 %v834, 127
    %v914 = vpop.permute.xlu0 %913
    %915 = vrot.lane.b32.xlu0 %v835, 127
    %v916 = vpop.permute.xlu0 %915
    %917 = vrot.lane.b32.xlu0 %v836, 127
    %v918 = vpop.permute.xlu0 %917
    %919 = vrot.lane.b32.xlu0 %v837, 127
    %v920 = vpop.permute.xlu0 %919
    %921 = vrot.lane.b32.xlu0 %v838, 127
    %v922 = vpop.permute.xlu0 %921
    %923 = vrot.lane.b32.xlu0 %v839, 127
    %v924 = vpop.permute.xlu0 %923
    %925 = vrot.lane.b32.xlu0 %v840, 127
    %v926 = vpop.permute.xlu0 %925
    %927 = vrot.lane.b32.xlu0 %v841, 127
    %v928 = vpop.permute.xlu0 %927
    %929 = vrot.lane.b32.xlu0 %v842, 127
    %v930 = vpop.permute.xlu0 %929
    %931 = vrot.lane.b32.xlu0 %v843, 127
    %v932 = vpop.permute.xlu0 %931
    %933 = vrot.lane.b32.xlu0 %v844, 127
    %v934 = vpop.permute.xlu0 %933
    %935 = vrot.lane.b32.xlu0 %v845, 127
    %v936 = vpop.permute.xlu0 %935
    %937 = vrot.lane.b32.xlu0 %v846, 127
    %v938 = vpop.permute.xlu0 %937
    %939 = vrot.lane.b32.xlu0 %v847, 127
    %v940 = vpop.permute.xlu0 %939
    %941 = vrot.lane.b32.xlu0 %v848, 127
    %v942 = vpop.permute.xlu0 %941
    %943 = vrot.lane.b32.xlu0 %v849, 127
    %v944 = vpop.permute.xlu0 %943
    %945 = vrot.lane.b32.xlu0 %v850, 127
    %v946 = vpop.permute.xlu0 %945
    %v979 = vadd.f32 %v786, %v884
    %v980 = vadd.f32 %v787, %v886
    %v981 = vadd.f32 %v788, %v888
    %v982 = vadd.f32 %v789, %v890
    %v983 = vadd.f32 %v790, %v892
    %v984 = vadd.f32 %v791, %v894
    %v985 = vadd.f32 %v792, %v896
    %v986 = vadd.f32 %v793, %v898
    %v987 = vadd.f32 %v794, %v900
    %v988 = vadd.f32 %v795, %v902
    %v989 = vadd.f32 %v796, %v904
    %v990 = vadd.f32 %v797, %v906
    %v991 = vadd.f32 %v798, %v908
    %v992 = vadd.f32 %v799, %v910
    %v993 = vadd.f32 %v800, %v912
    %v994 = vadd.f32 %v801, %v914
    %v995 = vadd.f32 %v802, %v916
    %v996 = vadd.f32 %v803, %v918
    %v997 = vadd.f32 %v804, %v920
    %v998 = vadd.f32 %v805, %v922
    %v999 = vadd.f32 %v806, %v924
    %v1000 = vadd.f32 %v807, %v926
    %v1001 = vadd.f32 %v808, %v928
    %v1002 = vadd.f32 %v809, %v930
    %v1003 = vadd.f32 %v810, %v932
    %v1004 = vadd.f32 %v811, %v934
    %v1005 = vadd.f32 %v812, %v936
    %v1006 = vadd.f32 %v813, %v938
    %v1007 = vadd.f32 %v814, %v940
    %v1008 = vadd.f32 %v815, %v942
    %v1009 = vadd.f32 %v816, %v944
    %v1010 = vadd.f32 %v817, %v946
    %v1011 = vstv %s66
    %v1012 = vadd.f32 %v979, %v1011
    %v1013 = vadd.f32 %v980, %v1011
    %v1014 = vadd.f32 %v981, %v1011
    %v1015 = vadd.f32 %v982, %v1011
    %v1016 = vadd.f32 %v983, %v1011
    %v1017 = vadd.f32 %v984, %v1011
    %v1018 = vadd.f32 %v985, %v1011
    %v1019 = vadd.f32 %v986, %v1011
    %v1020 = vadd.f32 %v987, %v1011
    %v1021 = vadd.f32 %v988, %v1011
    %v1022 = vadd.f32 %v989, %v1011
    %v1023 = vadd.f32 %v990, %v1011
    %v1024 = vadd.f32 %v991, %v1011
    %v1025 = vadd.f32 %v992, %v1011
    %v1026 = vadd.f32 %v993, %v1011
    %v1027 = vadd.f32 %v994, %v1011
    %v1028 = vadd.f32 %v995, %v1011
    %v1029 = vadd.f32 %v996, %v1011
    %v1030 = vadd.f32 %v997, %v1011
    %v1031 = vadd.f32 %v998, %v1011
    %v1032 = vadd.f32 %v999, %v1011
    %v1033 = vadd.f32 %v1000, %v1011
    %v1034 = vadd.f32 %v1001, %v1011
    %v1035 = vadd.f32 %v1002, %v1011
    %v1036 = vadd.f32 %v1003, %v1011
    %v1037 = vadd.f32 %v1004, %v1011
    %v1038 = vadd.f32 %v1005, %v1011
    %v1039 = vadd.f32 %v1006, %v1011
    %v1040 = vadd.f32 %v1007, %v1011
    %v1041 = vadd.f32 %v1008, %v1011
    %v1042 = vadd.f32 %v1009, %v1011
    %v1043 = vadd.f32 %v1010, %v1011
    %v1044 = vmax.f32 %v1012, 0.0
    %v1045 = vmax.f32 %v1013, 0.0
    %v1046 = vmax.f32 %v1014, 0.0
    %v1047 = vmax.f32 %v1015, 0.0
    %v1048 = vmax.f32 %v1016, 0.0
    %v1049 = vmax.f32 %v1017, 0.0
    %v1050 = vmax.f32 %v1018, 0.0
    %v1051 = vmax.f32 %v1019, 0.0
    %v1052 = vmax.f32 %v1020, 0.0
    %v1053 = vmax.f32 %v1021, 0.0
    %v1054 = vmax.f32 %v1022, 0.0
    %v1055 = vmax.f32 %v1023, 0.0
    %v1056 = vmax.f32 %v1024, 0.0
    %v1057 = vmax.f32 %v1025, 0.0
    %v1058 = vmax.f32 %v1026, 0.0
    %v1059 = vmax.f32 %v1027, 0.0
    %v1060 = vmax.f32 %v1028, 0.0
    %v1061 = vmax.f32 %v1029, 0.0
    %v1062 = vmax.f32 %v1030, 0.0
    %v1063 = vmax.f32 %v1031, 0.0
    %v1064 = vmax.f32 %v1032, 0.0
    %v1065 = vmax.f32 %v1033, 0.0
    %v1066 = vmax.f32 %v1034, 0.0
    %v1067 = vmax.f32 %v1035, 0.0
    %v1068 = vmax.f32 %v1036, 0.0
    %v1069 = vmax.f32 %v1037, 0.0
    %v1070 = vmax.f32 %v1038, 0.0
    %v1071 = vmax.f32 %v1039, 0.0
    %v1072 = vmax.f32 %v1040, 0.0
    %v1073 = vmax.f32 %v1041, 0.0
    %v1074 = vmax.f32 %v1042, 0.0
    %v1075 = vmax.f32 %v1043, 0.0
    %v1076 = vstv %s70
    %v1077 = vmul.f32 %v1044, %v1076
    %v1078 = vmul.f32 %v1045, %v1076
    %v1079 = vmul.f32 %v1046, %v1076
    %v1080 = vmul.f32 %v1047, %v1076
    %v1081 = vmul.f32 %v1048, %v1076
    %v1082 = vmul.f32 %v1049, %v1076
    %v1083 = vmul.f32 %v1050, %v1076
    %v1084 = vmul.f32 %v1051, %v1076
    %v1085 = vmul.f32 %v1052, %v1076
    %v1086 = vmul.f32 %v1053, %v1076
    %v1087 = vmul.f32 %v1054, %v1076
    %v1088 = vmul.f32 %v1055, %v1076
    %v1089 = vmul.f32 %v1056, %v1076
    %v1090 = vmul.f32 %v1057, %v1076
    %v1091 = vmul.f32 %v1058, %v1076
    %v1092 = vmul.f32 %v1059, %v1076
    %v1093 = vmul.f32 %v1060, %v1076
    %v1094 = vmul.f32 %v1061, %v1076
    %v1095 = vmul.f32 %v1062, %v1076
    %v1096 = vmul.f32 %v1063, %v1076
    %v1097 = vmul.f32 %v1064, %v1076
    %v1098 = vmul.f32 %v1065, %v1076
    %v1099 = vmul.f32 %v1066, %v1076
    %v1100 = vmul.f32 %v1067, %v1076
    %v1101 = vmul.f32 %v1068, %v1076
    %v1102 = vmul.f32 %v1069, %v1076
    %v1103 = vmul.f32 %v1070, %v1076
    %v1104 = vmul.f32 %v1071, %v1076
    %v1105 = vmul.f32 %v1072, %v1076
    %v1106 = vmul.f32 %v1073, %v1076
    %v1107 = vmul.f32 %v1074, %v1076
    %v1108 = vmul.f32 %v1075, %v1076
    %v1109 = vadd.f32 %v753, %v1077
    %v1110 = vadd.f32 %v754, %v1078
    %v1111 = vadd.f32 %v755, %v1079
    %v1112 = vadd.f32 %v756, %v1080
    %v1113 = vadd.f32 %v757, %v1081
    %v1114 = vadd.f32 %v758, %v1082
    %v1115 = vadd.f32 %v759, %v1083
    %v1116 = vadd.f32 %v760, %v1084
    %v1117 = vadd.f32 %v761, %v1085
    %v1118 = vadd.f32 %v762, %v1086
    %v1119 = vadd.f32 %v763, %v1087
    %v1120 = vadd.f32 %v764, %v1088
    %v1121 = vadd.f32 %v765, %v1089
    %v1122 = vadd.f32 %v766, %v1090
    %v1123 = vadd.f32 %v767, %v1091
    %v1124 = vadd.f32 %v768, %v1092
    %v1125 = vadd.f32 %v769, %v1093
    %v1126 = vadd.f32 %v770, %v1094
    %v1127 = vadd.f32 %v771, %v1095
    %v1128 = vadd.f32 %v772, %v1096
    %v1129 = vadd.f32 %v773, %v1097
    %v1130 = vadd.f32 %v774, %v1098
    %v1131 = vadd.f32 %v775, %v1099
    %v1132 = vadd.f32 %v776, %v1100
    %v1133 = vadd.f32 %v777, %v1101
    %v1134 = vadd.f32 %v778, %v1102
    %v1135 = vadd.f32 %v779, %v1103
    %v1136 = vadd.f32 %v780, %v1104
    %v1137 = vadd.f32 %v781, %v1105
    %v1138 = vadd.f32 %v782, %v1106
    %v1139 = vadd.f32 %v783, %v1107
    %v1140 = vadd.f32 %v784, %v1108
    %v1141 = vstv %s59
    %v1142 = vmul.f32 %v24, %v1141
    %v1143 = vmul.f32 %v25, %v1141
    %v1144 = vmul.f32 %v26, %v1141
    %v1145 = vmul.f32 %v27, %v1141
    %v1146 = vmul.f32 %v28, %v1141
    %v1147 = vmul.f32 %v29, %v1141
    %v1148 = vmul.f32 %v30, %v1141
    %v1149 = vmul.f32 %v31, %v1141
    %v1150 = vmul.f32 %v32, %v1141
    %v1151 = vmul.f32 %v33, %v1141
    %v1152 = vmul.f32 %v34, %v1141
    %v1153 = vmul.f32 %v35, %v1141
    %v1154 = vmul.f32 %v36, %v1141
    %v1155 = vmul.f32 %v37, %v1141
    %v1156 = vmul.f32 %v38, %v1141
    %v1157 = vmul.f32 %v39, %v1141
    %v1158 = vmul.f32 %v40, %v1141
    %v1159 = vmul.f32 %v41, %v1141
    %v1160 = vmul.f32 %v42, %v1141
    %v1161 = vmul.f32 %v43, %v1141
    %v1162 = vmul.f32 %v44, %v1141
    %v1163 = vmul.f32 %v45, %v1141
    %v1164 = vmul.f32 %v46, %v1141
    %v1165 = vmul.f32 %v47, %v1141
    %v1166 = vmul.f32 %v48, %v1141
    %v1167 = vmul.f32 %v49, %v1141
    %v1168 = vmul.f32 %v50, %v1141
    %v1169 = vmul.f32 %v51, %v1141
    %v1170 = vmul.f32 %v52, %v1141
    %v1171 = vmul.f32 %v53, %v1141
    %v1172 = vmul.f32 %v54, %v1141
    %v1173 = vmul.f32 %v55, %v1141
    %v1174 = vstv %s63
    %v1175 = vmul.f32 %v24, %v1174
    %v1176 = vmul.f32 %v25, %v1174
    %v1177 = vmul.f32 %v26, %v1174
    %v1178 = vmul.f32 %v27, %v1174
    %v1179 = vmul.f32 %v28, %v1174
    %v1180 = vmul.f32 %v29, %v1174
    %v1181 = vmul.f32 %v30, %v1174
    %v1182 = vmul.f32 %v31, %v1174
    %v1183 = vmul.f32 %v32, %v1174
    %v1184 = vmul.f32 %v33, %v1174
    %v1185 = vmul.f32 %v34, %v1174
    %v1186 = vmul.f32 %v35, %v1174
    %v1187 = vmul.f32 %v36, %v1174
    %v1188 = vmul.f32 %v37, %v1174
    %v1189 = vmul.f32 %v38, %v1174
    %v1190 = vmul.f32 %v39, %v1174
    %v1191 = vmul.f32 %v40, %v1174
    %v1192 = vmul.f32 %v41, %v1174
    %v1193 = vmul.f32 %v42, %v1174
    %v1194 = vmul.f32 %v43, %v1174
    %v1195 = vmul.f32 %v44, %v1174
    %v1196 = vmul.f32 %v45, %v1174
    %v1197 = vmul.f32 %v46, %v1174
    %v1198 = vmul.f32 %v47, %v1174
    %v1199 = vmul.f32 %v48, %v1174
    %v1200 = vmul.f32 %v49, %v1174
    %v1201 = vmul.f32 %v50, %v1174
    %v1202 = vmul.f32 %v51, %v1174
    %v1203 = vmul.f32 %v52, %v1174
    %v1204 = vmul.f32 %v53, %v1174
    %v1205 = vmul.f32 %v54, %v1174
    %v1206 = vmul.f32 %v55, %v1174
    %1239 = vrot.lane.b32.xlu0 %v1175, 127
    %v1240 = vpop.permute.xlu0 %1239
    %1241 = vrot.lane.b32.xlu0 %v1176, 127
    %v1242 = vpop.permute.xlu0 %1241
    %1243 = vrot.lane.b32.xlu0 %v1177, 127
    %v1244 = vpop.permute.xlu0 %1243
    %1245 = vrot.lane.b32.xlu0 %v1178, 127
    %v1246 = vpop.permute.xlu0 %1245
    %1247 = vrot.lane.b32.xlu0 %v1179, 127
    %v1248 = vpop.permute.xlu0 %1247
    %1249 = vrot.lane.b32.xlu0 %v1180, 127
    %v1250 = vpop.permute.xlu0 %1249
    %1251 = vrot.lane.b32.xlu0 %v1181, 127
    %v1252 = vpop.permute.xlu0 %1251
    %1253 = vrot.lane.b32.xlu0 %v1182, 127
    %v1254 = vpop.permute.xlu0 %1253
    %1255 = vrot.lane.b32.xlu0 %v1183, 127
    %v1256 = vpop.permute.xlu0 %1255
    %1257 = vrot.lane.b32.xlu0 %v1184, 127
    %v1258 = vpop.permute.xlu0 %1257
    %1259 = vrot.lane.b32.xlu0 %v1185, 127
    %v1260 = vpop.permute.xlu0 %1259
    %1261 = vrot.lane.b32.xlu0 %v1186, 127
    %v1262 = vpop.permute.xlu0 %1261
    %1263 = vrot.lane.b32.xlu0 %v1187, 127
    %v1264 = vpop.permute.xlu0 %1263
    %1265 = vrot.lane.b32.xlu0 %v1188, 127
    %v1266 = vpop.permute.xlu0 %1265
    %1267 = vrot.lane.b32.xlu0 %v1189, 127
    %v1268 = vpop.permute.xlu0 %1267
    %1269 = vrot.lane.b32.xlu0 %v1190, 127
    %v1270 = vpop.permute.xlu0 %1269
    %1271 = vrot.lane.b32.xlu0 %v1191, 127
    %v1272 = vpop.permute.xlu0 %1271
    %1273 = vrot.lane.b32.xlu0 %v1192, 127
    %v1274 = vpop.permute.xlu0 %1273
    %1275 = vrot.lane.b32.xlu0 %v1193, 127
    %v1276 = vpop.permute.xlu0 %1275
    %1277 = vrot.lane.b32.xlu0 %v1194, 127
    %v1278 = vpop.permute.xlu0 %1277
    %1279 = vrot.lane.b32.xlu0 %v1195, 127
    %v1280 = vpop.permute.xlu0 %1279
    %1281 = vrot.lane.b32.xlu0 %v1196, 127
    %v1282 = vpop.permute.xlu0 %1281
    %1283 = vrot.lane.b32.xlu0 %v1197, 127
    %v1284 = vpop.permute.xlu0 %1283
    %1285 = vrot.lane.b32.xlu0 %v1198, 127
    %v1286 = vpop.permute.xlu0 %1285
    %1287 = vrot.lane.b32.xlu0 %v1199, 127
    %v1288 = vpop.permute.xlu0 %1287
    %1289 = vrot.lane.b32.xlu0 %v1200, 127
    %v1290 = vpop.permute.xlu0 %1289
    %1291 = vrot.lane.b32.xlu0 %v1201, 127
    %v1292 = vpop.permute.xlu0 %1291
    %1293 = vrot.lane.b32.xlu0 %v1202, 127
    %v1294 = vpop.permute.xlu0 %1293
    %1295 = vrot.lane.b32.xlu0 %v1203, 127
    %v1296 = vpop.permute.xlu0 %1295
    %1297 = vrot.lane.b32.xlu0 %v1204, 127
    %v1298 = vpop.permute.xlu0 %1297
    %1299 = vrot.lane.b32.xlu0 %v1205, 127
    %v1300 = vpop.permute.xlu0 %1299
    %1301 = vrot.lane.b32.xlu0 %v1206, 127
    %v1302 = vpop.permute.xlu0 %1301
    %v1335 = vadd.f32 %v1142, %v1240
    %v1336 = vadd.f32 %v1143, %v1242
    %v1337 = vadd.f32 %v1144, %v1244
    %v1338 = vadd.f32 %v1145, %v1246
    %v1339 = vadd.f32 %v1146, %v1248
    %v1340 = vadd.f32 %v1147, %v1250
    %v1341 = vadd.f32 %v1148, %v1252
    %v1342 = vadd.f32 %v1149, %v1254
    %v1343 = vadd.f32 %v1150, %v1256
    %v1344 = vadd.f32 %v1151, %v1258
    %v1345 = vadd.f32 %v1152, %v1260
    %v1346 = vadd.f32 %v1153, %v1262
    %v1347 = vadd.f32 %v1154, %v1264
    %v1348 = vadd.f32 %v1155, %v1266
    %v1349 = vadd.f32 %v1156, %v1268
    %v1350 = vadd.f32 %v1157, %v1270
    %v1351 = vadd.f32 %v1158, %v1272
    %v1352 = vadd.f32 %v1159, %v1274
    %v1353 = vadd.f32 %v1160, %v1276
    %v1354 = vadd.f32 %v1161, %v1278
    %v1355 = vadd.f32 %v1162, %v1280
    %v1356 = vadd.f32 %v1163, %v1282
    %v1357 = vadd.f32 %v1164, %v1284
    %v1358 = vadd.f32 %v1165, %v1286
    %v1359 = vadd.f32 %v1166, %v1288
    %v1360 = vadd.f32 %v1167, %v1290
    %v1361 = vadd.f32 %v1168, %v1292
    %v1362 = vadd.f32 %v1169, %v1294
    %v1363 = vadd.f32 %v1170, %v1296
    %v1364 = vadd.f32 %v1171, %v1298
    %v1365 = vadd.f32 %v1172, %v1300
    %v1366 = vadd.f32 %v1173, %v1302
    %v1367 = vstv %s67
    %v1368 = vadd.f32 %v1335, %v1367
    %v1369 = vadd.f32 %v1336, %v1367
    %v1370 = vadd.f32 %v1337, %v1367
    %v1371 = vadd.f32 %v1338, %v1367
    %v1372 = vadd.f32 %v1339, %v1367
    %v1373 = vadd.f32 %v1340, %v1367
    %v1374 = vadd.f32 %v1341, %v1367
    %v1375 = vadd.f32 %v1342, %v1367
    %v1376 = vadd.f32 %v1343, %v1367
    %v1377 = vadd.f32 %v1344, %v1367
    %v1378 = vadd.f32 %v1345, %v1367
    %v1379 = vadd.f32 %v1346, %v1367
    %v1380 = vadd.f32 %v1347, %v1367
    %v1381 = vadd.f32 %v1348, %v1367
    %v1382 = vadd.f32 %v1349, %v1367
    %v1383 = vadd.f32 %v1350, %v1367
    %v1384 = vadd.f32 %v1351, %v1367
    %v1385 = vadd.f32 %v1352, %v1367
    %v1386 = vadd.f32 %v1353, %v1367
    %v1387 = vadd.f32 %v1354, %v1367
    %v1388 = vadd.f32 %v1355, %v1367
    %v1389 = vadd.f32 %v1356, %v1367
    %v1390 = vadd.f32 %v1357, %v1367
    %v1391 = vadd.f32 %v1358, %v1367
    %v1392 = vadd.f32 %v1359, %v1367
    %v1393 = vadd.f32 %v1360, %v1367
    %v1394 = vadd.f32 %v1361, %v1367
    %v1395 = vadd.f32 %v1362, %v1367
    %v1396 = vadd.f32 %v1363, %v1367
    %v1397 = vadd.f32 %v1364, %v1367
    %v1398 = vadd.f32 %v1365, %v1367
    %v1399 = vadd.f32 %v1366, %v1367
    %v1400 = vmax.f32 %v1368, 0.0
    %v1401 = vmax.f32 %v1369, 0.0
    %v1402 = vmax.f32 %v1370, 0.0
    %v1403 = vmax.f32 %v1371, 0.0
    %v1404 = vmax.f32 %v1372, 0.0
    %v1405 = vmax.f32 %v1373, 0.0
    %v1406 = vmax.f32 %v1374, 0.0
    %v1407 = vmax.f32 %v1375, 0.0
    %v1408 = vmax.f32 %v1376, 0.0
    %v1409 = vmax.f32 %v1377, 0.0
    %v1410 = vmax.f32 %v1378, 0.0
    %v1411 = vmax.f32 %v1379, 0.0
    %v1412 = vmax.f32 %v1380, 0.0
    %v1413 = vmax.f32 %v1381, 0.0
    %v1414 = vmax.f32 %v1382, 0.0
    %v1415 = vmax.f32 %v1383, 0.0
    %v1416 = vmax.f32 %v1384, 0.0
    %v1417 = vmax.f32 %v1385, 0.0
    %v1418 = vmax.f32 %v1386, 0.0
    %v1419 = vmax.f32 %v1387, 0.0
    %v1420 = vmax.f32 %v1388, 0.0
    %v1421 = vmax.f32 %v1389, 0.0
    %v1422 = vmax.f32 %v1390, 0.0
    %v1423 = vmax.f32 %v1391, 0.0
    %v1424 = vmax.f32 %v1392, 0.0
    %v1425 = vmax.f32 %v1393, 0.0
    %v1426 = vmax.f32 %v1394, 0.0
    %v1427 = vmax.f32 %v1395, 0.0
    %v1428 = vmax.f32 %v1396, 0.0
    %v1429 = vmax.f32 %v1397, 0.0
    %v1430 = vmax.f32 %v1398, 0.0
    %v1431 = vmax.f32 %v1399, 0.0
    %v1432 = vstv %s71
    %v1433 = vmul.f32 %v1400, %v1432
    %v1434 = vmul.f32 %v1401, %v1432
    %v1435 = vmul.f32 %v1402, %v1432
    %v1436 = vmul.f32 %v1403, %v1432
    %v1437 = vmul.f32 %v1404, %v1432
    %v1438 = vmul.f32 %v1405, %v1432
    %v1439 = vmul.f32 %v1406, %v1432
    %v1440 = vmul.f32 %v1407, %v1432
    %v1441 = vmul.f32 %v1408, %v1432
    %v1442 = vmul.f32 %v1409, %v1432
    %v1443 = vmul.f32 %v1410, %v1432
    %v1444 = vmul.f32 %v1411, %v1432
    %v1445 = vmul.f32 %v1412, %v1432
    %v1446 = vmul.f32 %v1413, %v1432
    %v1447 = vmul.f32 %v1414, %v1432
    %v1448 = vmul.f32 %v1415, %v1432
    %v1449 = vmul.f32 %v1416, %v1432
    %v1450 = vmul.f32 %v1417, %v1432
    %v1451 = vmul.f32 %v1418, %v1432
    %v1452 = vmul.f32 %v1419, %v1432
    %v1453 = vmul.f32 %v1420, %v1432
    %v1454 = vmul.f32 %v1421, %v1432
    %v1455 = vmul.f32 %v1422, %v1432
    %v1456 = vmul.f32 %v1423, %v1432
    %v1457 = vmul.f32 %v1424, %v1432
    %v1458 = vmul.f32 %v1425, %v1432
    %v1459 = vmul.f32 %v1426, %v1432
    %v1460 = vmul.f32 %v1427, %v1432
    %v1461 = vmul.f32 %v1428, %v1432
    %v1462 = vmul.f32 %v1429, %v1432
    %v1463 = vmul.f32 %v1430, %v1432
    %v1464 = vmul.f32 %v1431, %v1432
    %v1465 = vadd.f32 %v1109, %v1433
    %v1466 = vadd.f32 %v1110, %v1434
    %v1467 = vadd.f32 %v1111, %v1435
    %v1468 = vadd.f32 %v1112, %v1436
    %v1469 = vadd.f32 %v1113, %v1437
    %v1470 = vadd.f32 %v1114, %v1438
    %v1471 = vadd.f32 %v1115, %v1439
    %v1472 = vadd.f32 %v1116, %v1440
    %v1473 = vadd.f32 %v1117, %v1441
    %v1474 = vadd.f32 %v1118, %v1442
    %v1475 = vadd.f32 %v1119, %v1443
    %v1476 = vadd.f32 %v1120, %v1444
    %v1477 = vadd.f32 %v1121, %v1445
    %v1478 = vadd.f32 %v1122, %v1446
    %v1479 = vadd.f32 %v1123, %v1447
    %v1480 = vadd.f32 %v1124, %v1448
    %v1481 = vadd.f32 %v1125, %v1449
    %v1482 = vadd.f32 %v1126, %v1450
    %v1483 = vadd.f32 %v1127, %v1451
    %v1484 = vadd.f32 %v1128, %v1452
    %v1485 = vadd.f32 %v1129, %v1453
    %v1486 = vadd.f32 %v1130, %v1454
    %v1487 = vadd.f32 %v1131, %v1455
    %v1488 = vadd.f32 %v1132, %v1456
    %v1489 = vadd.f32 %v1133, %v1457
    %v1490 = vadd.f32 %v1134, %v1458
    %v1491 = vadd.f32 %v1135, %v1459
    %v1492 = vadd.f32 %v1136, %v1460
    %v1493 = vadd.f32 %v1137, %v1461
    %v1494 = vadd.f32 %v1138, %v1462
    %v1495 = vadd.f32 %v1139, %v1463
    %v1496 = vadd.f32 %v1140, %v1464
    %v1497 = vstv %s72
    %v1498 = vadd.f32 %v1465, %v1497
    %v1499 = vadd.f32 %v1466, %v1497
    %v1500 = vadd.f32 %v1467, %v1497
    %v1501 = vadd.f32 %v1468, %v1497
    %v1502 = vadd.f32 %v1469, %v1497
    %v1503 = vadd.f32 %v1470, %v1497
    %v1504 = vadd.f32 %v1471, %v1497
    %v1505 = vadd.f32 %v1472, %v1497
    %v1506 = vadd.f32 %v1473, %v1497
    %v1507 = vadd.f32 %v1474, %v1497
    %v1508 = vadd.f32 %v1475, %v1497
    %v1509 = vadd.f32 %v1476, %v1497
    %v1510 = vadd.f32 %v1477, %v1497
    %v1511 = vadd.f32 %v1478, %v1497
    %v1512 = vadd.f32 %v1479, %v1497
    %v1513 = vadd.f32 %v1480, %v1497
    %v1514 = vadd.f32 %v1481, %v1497
    %v1515 = vadd.f32 %v1482, %v1497
    %v1516 = vadd.f32 %v1483, %v1497
    %v1517 = vadd.f32 %v1484, %v1497
    %v1518 = vadd.f32 %v1485, %v1497
    %v1519 = vadd.f32 %v1486, %v1497
    %v1520 = vadd.f32 %v1487, %v1497
    %v1521 = vadd.f32 %v1488, %v1497
    %v1522 = vadd.f32 %v1489, %v1497
    %v1523 = vadd.f32 %v1490, %v1497
    %v1524 = vadd.f32 %v1491, %v1497
    %v1525 = vadd.f32 %v1492, %v1497
    %v1526 = vadd.f32 %v1493, %v1497
    %v1527 = vadd.f32 %v1494, %v1497
    %v1528 = vadd.f32 %v1495, %v1497
    %v1529 = vadd.f32 %v1496, %v1497
    %vm1530 = vcmask 7168
    %1531 = vst.msk [vmem:[%s2] sm:$0xff] %vm1530, %v1498
    %1532 = vst.msk [vmem:[%s2 + $0x8] sm:$0xff] %vm1530, %v1499
    %1533 = vst.msk [vmem:[%s2 + $0x10] sm:$0xff] %vm1530, %v1500
    %1534 = vst.msk [vmem:[%s2 + $0x18] sm:$0xff] %vm1530, %v1501
    %1535 = vst.msk [vmem:[%s2 + $0x20] sm:$0xff] %vm1530, %v1502
    %1536 = vst.msk [vmem:[%s2 + $0x28] sm:$0xff] %vm1530, %v1503
    %1537 = vst.msk [vmem:[%s2 + $0x30] sm:$0xff] %vm1530, %v1504
    %1538 = vst.msk [vmem:[%s2 + $0x38] sm:$0xff] %vm1530, %v1505
    %1539 = vst.msk [vmem:[%s2 + $0x40] sm:$0xff] %vm1530, %v1506
    %1540 = vst.msk [vmem:[%s2 + $0x48] sm:$0xff] %vm1530, %v1507
    %1541 = vst.msk [vmem:[%s2 + $0x50] sm:$0xff] %vm1530, %v1508
    %1542 = vst.msk [vmem:[%s2 + $0x58] sm:$0xff] %vm1530, %v1509
    %1543 = vst.msk [vmem:[%s2 + $0x60] sm:$0xff] %vm1530, %v1510
    %1544 = vst.msk [vmem:[%s2 + $0x68] sm:$0xff] %vm1530, %v1511
    %1545 = vst.msk [vmem:[%s2 + $0x70] sm:$0xff] %vm1530, %v1512
    %1546 = vst.msk [vmem:[%s2 + $0x78] sm:$0xff] %vm1530, %v1513
    %1547 = vst.msk [vmem:[%s2 + $0x80] sm:$0xff] %vm1530, %v1514
    %1548 = vst.msk [vmem:[%s2 + $0x88] sm:$0xff] %vm1530, %v1515
    %1549 = vst.msk [vmem:[%s2 + $0x90] sm:$0xff] %vm1530, %v1516
    %1550 = vst.msk [vmem:[%s2 + $0x98] sm:$0xff] %vm1530, %v1517
    %1551 = vst.msk [vmem:[%s2 + $0xa0] sm:$0xff] %vm1530, %v1518
    %1552 = vst.msk [vmem:[%s2 + $0xa8] sm:$0xff] %vm1530, %v1519
    %1553 = vst.msk [vmem:[%s2 + $0xb0] sm:$0xff] %vm1530, %v1520
    %1554 = vst.msk [vmem:[%s2 + $0xb8] sm:$0xff] %vm1530, %v1521
    %1555 = vst.msk [vmem:[%s2 + $0xc0] sm:$0xff] %vm1530, %v1522
    %1556 = vst.msk [vmem:[%s2 + $0xc8] sm:$0xff] %vm1530, %v1523
    %1557 = vst.msk [vmem:[%s2 + $0xd0] sm:$0xff] %vm1530, %v1524
    %1558 = vst.msk [vmem:[%s2 + $0xd8] sm:$0xff] %vm1530, %v1525
    %1559 = vst.msk [vmem:[%s2 + $0xe0] sm:$0xff] %vm1530, %v1526
    %1560 = vst.msk [vmem:[%s2 + $0xe8] sm:$0xff] %vm1530, %v1527
    %1561 = vst.msk [vmem:[%s2 + $0xf0] sm:$0xff] %vm1530, %v1528
    %1562 = vst.msk [vmem:[%s2 + $0xf8] sm:$0xff] %vm1530, %v1529
    // Predicated region
    $region14: #{simple_module_forward.1} parent=1 // pred_check
      _
    $region15: #{simple_module_forward.1} parent=1 // pred_check_branch
      %1564 = sbr.rel (0) target = $region17
    $region16: #{simple_module_forward.1} parent=1 // pred_region
      _
    $region17: #{simple_module_forward.1} parent=1 // pred_fallthru
      _
    // Predicated region
    $region18: #{simple_module_forward.1} parent=1 // pred_check
      _
    $region19: #{simple_module_forward.1} parent=1 // pred_check_branch
      %1566 = sbr.rel (0) target = $region21
    $region20: #{simple_module_forward.1} parent=1 // pred_region
      _
    $region21: #{simple_module_forward.1} parent=1 // pred_fallthru
      _
    %1567 = vsyncpa [#allocation3], 1

</llo_original>
